<compile_context>
chip_gen: v7x
topology: tpu7x:2x2x1
jax: 0.10.0
libtpu: 0.0.40
codegen_flags: <defaults>
</compile_context>

<pallas_src>
import jax
import jax.numpy as jnp
from jax.experimental import pallas as pl
from jax.experimental.pallas import tpu as pltpu


# ---------------- helpers ----------------

def _round_up(x, m):
    return ((x + m - 1) // m) * m


def _pick_tm(K, Cout, M, dtype_bytes, vmem_budget_bytes=8 * 1024 * 1024):
    # double-buffered (K, tm) patch tile + (Cout, tm) f32 output tile must fit the
    # VMEM budget (keeps v7x's 64 MiB physical / 32 MiB scoped VMEM safe).
    per_row = 2 * (dtype_bytes * K + 4 * Cout)
    tm = (vmem_budget_bytes // per_row) // 128 * 128
    tm = max(128, min(2048, tm))
    tm = min(tm, _round_up(M, 128))
    return tm


# ---------------- Pallas kernels ----------------

def _gemm_stats_kernel(w_ref, p_ref, s_ref, sq_ref):
    # (Cout, K) @ (K, tm) on the MXU; emit per-channel partial sums for BN stats.
    y = jnp.dot(w_ref[...], p_ref[...], preferred_element_type=jnp.float32)
    s_ref[...] = jnp.sum(y, axis=1, keepdims=True)       # (Cout, 1)
    sq_ref[...] = jnp.sum(y * y, axis=1, keepdims=True)  # (Cout, 1)


def _gemm_bn_prelu_kernel(w_ref, p_ref, aff_ref, o_ref):
    # Recompute the GEMM (cheaper than a conv_out HBM round trip at this K/Cout),
    # then fused BN affine + PReLU. Output tile is (Cout, tm): lane dim = tm.
    y = jnp.dot(w_ref[...], p_ref[...], preferred_element_type=jnp.float32)
    scale = aff_ref[:, 0:1]
    shift = aff_ref[:, 1:2]
    alpha = aff_ref[:, 2:3]
    z = y * scale + shift
    o_ref[...] = jnp.where(z > 0, z, alpha * z).astype(o_ref.dtype)


# ---------------- wrapper ----------------

def conv_bn_prelu(x, weight, bias, gamma, beta, alpha, *, stride=1, padding=0,
                  eps=1e-5, compute_dtype=jnp.float32):
    """x: (N, Cin, H, W) NCHW.  weight: (Cout, Cin, kh, kw).  Returns NCHW.

    compute_dtype=jnp.bfloat16 is recommended on v6e/v7x (MXU-native, halves the
    patch HBM traffic); f32 default keeps bit-tight agreement with the reference.
    """
    del bias  # training-mode BN cancels a per-channel conv bias exactly (no-op)
    N, Cin, H, W = x.shape
    Cout, _, kh, kw = weight.shape
    OH = (H + 2 * padding - kh) // stride + 1
    OW = (W + 2 * padding - kw) // stride + 1
    M = N * OH * OW
    K = Cin * kh * kw

    # --- glue: pad + im2col in (K, M) layout (lane dim = M) ---
    # TODO(synk): im2col is still materialized by XLA; a direct-conv formulation
    # (grid over kh*kw taps with shifted index_maps) would avoid the kh*kw-expanded copy.
    xp = jnp.pad(x, ((0, 0), (0, 0), (padding, padding), (padding, padding)))
    taps = []
    for i in range(kh):
        for j in range(kw):
            taps.append(xp[:, :, i:i + stride * OH:stride, j:j + stride * OW:stride])
    pat = jnp.stack(taps, axis=0).reshape(kh, kw, N, Cin, OH, OW)
    pat = pat.transpose(3, 0, 1, 2, 4, 5).reshape(K, M).astype(compute_dtype)

    w_c = weight.reshape(Cout, K).astype(compute_dtype)            # (Cout, K)

    itemsize = jnp.dtype(compute_dtype).itemsize
    tm = _pick_tm(K, Cout, M, itemsize)
    M_pad = _round_up(M, tm)
    if M_pad != M:
        pat = jnp.pad(pat, ((0, 0), (0, M_pad - M)))               # neutral for stats
    grid_n = M_pad // tm

    cparams = pltpu.CompilerParams(
        dimension_semantics=("parallel",),        # shardable across v7x's 2 TCs
        vmem_limit_bytes=32 * 1024 * 1024,        # explicit budget (v5e default=16MiB)
    )
    gemm_flops = 2 * M_pad * K * Cout

    # --- pass 1: GEMM + per-tile BN batch statistics (conv_out never hits HBM) ---
    s, sq = pl.pallas_call(
        _gemm_stats_kernel,
        out_shape=(jax.ShapeDtypeStruct((grid_n, Cout, 1), jnp.float32),
                   jax.ShapeDtypeStruct((grid_n, Cout, 1), jnp.float32)),
        grid=(grid_n,),
        in_specs=[
            pl.BlockSpec((Cout, K), lambda i: (0, 0)),             # resident weight
            pl.BlockSpec((K, tm), lambda i: (0, i)),               # patch tile
        ],
        out_specs=(pl.BlockSpec((None, Cout, 1), lambda i: (i, 0, 0)),
                   pl.BlockSpec((None, Cout, 1), lambda i: (i, 0, 0))),
        compiler_params=cparams,
        cost_estimate=pl.CostEstimate(
            flops=gemm_flops, transcendentals=0,
            bytes_accessed=itemsize * (K * M_pad + K * Cout) + 8 * grid_n * Cout),
    )(w_c, pat)

    # tiny (grid, Cout) reduction + per-channel affine folding (glue)
    s_tot = jnp.sum(s, axis=(0, 2))
    sq_tot = jnp.sum(sq, axis=(0, 2))
    mean = s_tot / M
    var = jnp.maximum(sq_tot / M - mean * mean, 0.0)               # biased variance
    scale = gamma.astype(jnp.float32) * jax.lax.rsqrt(var + eps)
    shift = beta.astype(jnp.float32) - mean * scale
    alpha_c = jnp.broadcast_to(jnp.asarray(alpha, jnp.float32).reshape(-1), (Cout,))
    aff = jnp.stack([scale, shift, alpha_c], axis=1)               # (Cout, 3)

    # --- pass 2: recompute GEMM + fused BN affine + PReLU, lane-dense (Cout, M) out ---
    out = pl.pallas_call(
        _gemm_bn_prelu_kernel,
        out_shape=jax.ShapeDtypeStruct((Cout, M_pad), jnp.float32),
        grid=(grid_n,),
        in_specs=[
            pl.BlockSpec((Cout, K), lambda i: (0, 0)),
            pl.BlockSpec((K, tm), lambda i: (0, i)),
            pl.BlockSpec((Cout, 3), lambda i: (0, 0)),             # packed scale/shift/alpha
        ],
        out_specs=pl.BlockSpec((Cout, tm), lambda i: (0, i)),
        compiler_params=cparams,
        cost_estimate=pl.CostEstimate(
            flops=gemm_flops, transcendentals=0,
            bytes_accessed=itemsize * (K * M_pad + K * Cout) + 4 * Cout * M_pad),
    )(w_c, pat, aff)

    out = out[:, :M].reshape(Cout, N, OH, OW).transpose(1, 0, 2, 3)
    return out


# ---------------- pure-JAX reference (for correctness check) ----------------

def _reference(x, weight, bias, gamma, beta, alpha, *, stride, padding, eps=1e-5):
    y = jax.lax.conv_general_dilated(
        x.astype(jnp.float32), weight.astype(jnp.float32),
        window_strides=(stride, stride),
        padding=[(padding, padding), (padding, padding)],
        dimension_numbers=("NCHW", "OIHW", "NCHW"),
    ) + bias.reshape(1, -1, 1, 1)
    mean = jnp.mean(y, axis=(0, 2, 3), keepdims=True)
    var = jnp.mean((y - mean) ** 2, axis=(0, 2, 3), keepdims=True)
    z = (y - mean) / jnp.sqrt(var + eps) * gamma.reshape(1, -1, 1, 1) \
        + beta.reshape(1, -1, 1, 1)
    return jnp.where(z > 0, z, alpha * z)


if __name__ == "__main__":
    # ConvolutionalLayer(in_channels=4, out_channels=8, kernel_size=3,
    #                    stride=1, padding=1, bias=True)
    N, Cin, H, W = 2, 4, 16, 16
    Cout, k, stride, padding = 8, 3, 1, 1

    key = jax.random.PRNGKey(0)
    kx, kwt, kb = jax.random.split(key, 3)

    x = jax.random.normal(kx, (N, Cin, H, W), dtype=jnp.float32)

    fan_in = Cin * k * k
    bound = 1.0 / (fan_in ** 0.5)
    weight = jax.random.uniform(kwt, (Cout, Cin, k, k), jnp.float32, -bound, bound)
    bias = jax.random.uniform(kb, (Cout,), jnp.float32, -bound, bound)
    gamma = jnp.ones((Cout,), jnp.float32)     # BatchNorm2d weight init
    beta = jnp.zeros((Cout,), jnp.float32)     # BatchNorm2d bias init
    alpha = jnp.float32(0.25)                  # PReLU single-param init

    out = conv_bn_prelu(x, weight, bias, gamma, beta, alpha,
                        stride=stride, padding=padding)
    out = jax.block_until_ready(out)

    ref = _reference(x, weight, bias, gamma, beta, alpha,
                     stride=stride, padding=padding)
    assert out.shape == (N, Cout, H, W)
    assert jnp.allclose(out, ref, rtol=1e-3, atol=1e-3), \
        float(jnp.max(jnp.abs(out - ref)))

    print("KERNEL_OK")
</pallas_src>

<mosaic_0001>
module attributes {stable_mosaic.version = 11 : i64} {
  func.func @_gemm_stats_kernel(%arg0: i32, %arg1: memref<8x36xf32, #tpu.memory_space<vmem>>, %arg2: memref<36x512xf32, #tpu.memory_space<vmem>>, %arg3: memref<1x8x1xf32, #tpu.memory_space<vmem>>, %arg4: memref<1x8x1xf32, #tpu.memory_space<vmem>>) attributes {dimension_semantics = [#tpu.dimension_semantics<parallel>], iteration_bounds = array<i64: 1>, scalar_prefetch = 0 : i64, scratch_operands = 0 : i64, tpu.core_type = #tpu.core_type<tc>, window_params = [{pipeline_mode = #tpu.pipeline_mode<synchronous>, transform_indices = @transform_0, window_bounds = array<i64: 8, 36>}, {transform_indices = @transform_1, window_bounds = array<i64: 36, 512>}, {transform_indices = @transform_2, window_bounds = array<i64: 1, 8, 1>}, {transform_indices = @transform_3, window_bounds = array<i64: 1, 8, 1>}]} {
    %c0 = arith.constant 0 : index
    %c0_0 = arith.constant 0 : index
    %0 = vector.load %arg1[%c0, %c0_0] : memref<8x36xf32, #tpu.memory_space<vmem>>, vector<8x36xf32>
    %c0_1 = arith.constant 0 : index
    %c0_2 = arith.constant 0 : index
    %1 = vector.load %arg2[%c0_1, %c0_2] : memref<36x512xf32, #tpu.memory_space<vmem>>, vector<36x512xf32>
    %cst = arith.constant dense<0.000000e+00> : vector<8x512xf32>
    %2 = tpu.matmul %0, %1, %cst {dimension_numbers = #tpu.dot_dimension_numbers<[1], [0], [0], [1], [0, 0, 1, 1], [], []>} : vector<8x36xf32>, vector<36x512xf32>, vector<8x512xf32> -> vector<8x512xf32>
    %cst_3 = arith.constant dense<0.000000e+00> : vector<8xf32>
    %3 = vector.multi_reduction <add>, %2, %cst_3 [1] : vector<8x512xf32> to vector<8xf32>
    %4 = vector.shape_cast %3 : vector<8xf32> to vector<8x1xf32>
    %c0_4 = arith.constant 0 : index
    %c0_5 = arith.constant 0 : index
    %c0_6 = arith.constant 0 : index
    %5 = vector.load %arg3[%c0_4, %c0_5, %c0_6] : memref<1x8x1xf32, #tpu.memory_space<vmem>>, vector<1x8x1xf32>
    %6 = vector.shape_cast %5 : vector<1x8x1xf32> to vector<8x1xf32>
    %7 = vector.shape_cast %4 : vector<8x1xf32> to vector<1x8x1xf32>
    tpu.vector_store %arg3[%c0_4, %c0_5, %c0_6], %7 {strides = array<i32>} : memref<1x8x1xf32, #tpu.memory_space<vmem>>, vector<1x8x1xf32>,
    %8 = arith.mulf %2, %2 : vector<8x512xf32>
    %cst_7 = arith.constant dense<0.000000e+00> : vector<8xf32>
    %9 = vector.multi_reduction <add>, %8, %cst_7 [1] : vector<8x512xf32> to vector<8xf32>
    %10 = vector.shape_cast %9 : vector<8xf32> to vector<8x1xf32>
    %c0_8 = arith.constant 0 : index
    %c0_9 = arith.constant 0 : index
    %c0_10 = arith.constant 0 : index
    %11 = vector.load %arg4[%c0_8, %c0_9, %c0_10] : memref<1x8x1xf32, #tpu.memory_space<vmem>>, vector<1x8x1xf32>
    %12 = vector.shape_cast %11 : vector<1x8x1xf32> to vector<8x1xf32>
    %13 = vector.shape_cast %10 : vector<8x1xf32> to vector<1x8x1xf32>
    tpu.vector_store %arg4[%c0_8, %c0_9, %c0_10], %13 {strides = array<i32>} : memref<1x8x1xf32, #tpu.memory_space<vmem>>, vector<1x8x1xf32>,
    return
  }
  func.func @transform_0(%arg0: i32) -> (i32, i32) {
    %c0_i32 = arith.constant 0 : i32
    %c0_i32_0 = arith.constant 0 : i32
    %c0_i32_1 = arith.constant 0 : i32
    return %c0_i32, %c0_i32_0 : i32, i32
  }
  func.func @transform_1(%arg0: i32) -> (i32, i32) {
    %c0_i32 = arith.constant 0 : i32
    %c0_i32_0 = arith.constant 0 : i32
    return %c0_i32, %arg0 : i32, i32
  }
  func.func @transform_2(%arg0: i32) -> (i32, i32, i32) {
    %c0_i32 = arith.constant 0 : i32
    %c0_i32_0 = arith.constant 0 : i32
    %c0_i32_1 = arith.constant 0 : i32
    return %arg0, %c0_i32, %c0_i32_0 : i32, i32, i32
  }
  func.func @transform_3(%arg0: i32) -> (i32, i32, i32) {
    %c0_i32 = arith.constant 0 : i32
    %c0_i32_0 = arith.constant 0 : i32
    %c0_i32_1 = arith.constant 0 : i32
    return %arg0, %c0_i32, %c0_i32_0 : i32, i32, i32
  }
}

</mosaic_0001>

<llo_original>
// kernel: tpu_custom_call.1
$region0: #{tpu_custom_call.1}
  #allocation0 [shape = 'u32[]', space=smem, size = 0x4, offset = 0x4, fixed_abs, tag = 'smem constant byte address 0x4 - core index']
  #allocation1 [shape = 'u32[144,128]{1,0:T(1,128)}', space=vmem, size = 0x12000, scoped, tag = 'internal scratch']
  %s0 = inlined_call_operand.hbm [shape: f32[8,36], index: 0, kind: input, shape index: {}]
  %s1 = inlined_call_operand.hbm [shape: f32[36,512], index: 1, kind: input, shape index: {}]
  %s2 = inlined_call_operand.vmem [shape: f32[1,8,1], index: 2, kind: output, shape index: {0}]
  %s3 = inlined_call_operand.vmem [shape: f32[1,8,1], index: 3, kind: output, shape index: {1}]
  %4 = xla_tuple %s2, %s3
  %s5 = sld [smem:[#allocation0]]
  $region34: #{tpu_custom_call.1} parent=0
    _
  %s7 = ssub.s32 1, %s5
  %s8 = scalar_select 0, %s7, %s5
  $region1: #{tpu_custom_call.1} parent=0
    #allocation2 [shape = 'u8[4096]{0}', space=vmem, size = 0x1000, scoped, tag = 'input window, operand 0, single buffered']
    #allocation3 [shape = 's32[1]{0}', space=sflag, size = 0x4, scoped, tag = 'scoped memory for tpu_custom_call.1']
    #allocation4 [shape = 'u8[81920]{0}', space=vmem, size = 0x14000, scoped, tag = 'input window, operand 1, single buffered']
    #allocation5 [shape = 's32[1]{0}', space=sflag, size = 0x4, scoped, tag = 'scoped memory for tpu_custom_call.1']
    %9 = vsyncpa [#allocation3], 0
    %10 = vsyncpa [#allocation5], 0
    // Predicated region
    $region2: #{tpu_custom_call.1} parent=1 // pred_check
      _
    $region3: #{tpu_custom_call.1} parent=1 // pred_check_branch
      %12 = sbr.rel (0) target = $region5
    $region4: #{tpu_custom_call.1} parent=1 // pred_region
      %s14 = ssub.s32 128, 128
      %15 = vsyncadd [#allocation3], %s14
      %s17 = sshll.u32 [#allocation2], 4
      %s18 = int_to_ptr.vmem [resolvable:$true] %s17
      %20 = dma.hbm_to_vmem [thread:$0]  %s0, 128, %s18, [#allocation3]
    $region5: #{tpu_custom_call.1} parent=1 // pred_fallthru
      _
    // Predicated region
    $region6: #{tpu_custom_call.1} parent=1 // pred_check
      _
    $region7: #{tpu_custom_call.1} parent=1 // pred_check_branch
      %22 = sbr.rel (0) target = $region9
    $region8: #{tpu_custom_call.1} parent=1 // pred_region
      %s24 = ssub.s32 2560, 2560
      %25 = vsyncadd [#allocation5], %s24
      %s26 = sshll.u32 [#allocation4], 4
      %s27 = int_to_ptr.vmem [resolvable:$true] %s26
      %32 = dma.hbm_to_vmem [thread:$0]  %s1, 2560, %s27, [#allocation5], 512, 512, 32
    $region9: #{tpu_custom_call.1} parent=1 // pred_fallthru
      _
    // Predicated region
    $region10: #{tpu_custom_call.1} parent=1 // pred_check
      _
    $region11: #{tpu_custom_call.1} parent=1 // pred_check_branch
      %34 = sbr.rel (0) target = $region13
    $region12: #{tpu_custom_call.1} parent=1 // pred_region
      %35 = dma.done [#allocation3], 128
    $region13: #{tpu_custom_call.1} parent=1 // pred_fallthru
      _
    // Predicated region
    $region14: #{tpu_custom_call.1} parent=1 // pred_check
      _
    $region15: #{tpu_custom_call.1} parent=1 // pred_check_branch
      %37 = sbr.rel (0) target = $region17
    $region16: #{tpu_custom_call.1} parent=1 // pred_region
      %38 = dma.done [#allocation5], 2560
    $region17: #{tpu_custom_call.1} parent=1 // pred_fallthru
      _
    %v39 = vld [vmem:[#allocation2] sm:$0xff]
    %v40 = vld [vmem:[#allocation4] sm:$0xff]
    %v41 = vld [vmem:[#allocation4 + $0x8] sm:$0xff]
    %v42 = vld [vmem:[#allocation4 + $0x10] sm:$0xff]
    %v43 = vld [vmem:[#allocation4 + $0x18] sm:$0xff]
    %v44 = vld [vmem:[#allocation4 + $0x20] sm:$0xff]
    %v45 = vld [vmem:[#allocation4 + $0x28] sm:$0xff]
    %v46 = vld [vmem:[#allocation4 + $0x30] sm:$0xff]
    %v47 = vld [vmem:[#allocation4 + $0x38] sm:$0xff]
    %v48 = vld [vmem:[#allocation4 + $0x40] sm:$0xff]
    %v49 = vld [vmem:[#allocation4 + $0x48] sm:$0xff]
    %v50 = vld [vmem:[#allocation4 + $0x50] sm:$0xff]
    %v51 = vld [vmem:[#allocation4 + $0x58] sm:$0xff]
    %v52 = vld [vmem:[#allocation4 + $0x60] sm:$0xff]
    %v53 = vld [vmem:[#allocation4 + $0x68] sm:$0xff]
    %v54 = vld [vmem:[#allocation4 + $0x70] sm:$0xff]
    %v55 = vld [vmem:[#allocation4 + $0x78] sm:$0xff]
    %v56 = vld [vmem:[#allocation4 + $0x80] sm:$0xf]
    %v57 = vld [vmem:[#allocation4 + $0x88] sm:$0xf]
    %v58 = vld [vmem:[#allocation4 + $0x90] sm:$0xf]
    %v59 = vld [vmem:[#allocation4 + $0x98] sm:$0xf]
    %vm60 = vcmask 293888
    %v62 = vsel %vm60, %v39, 0
    %vm64 = vcmask 1043456
    %v66 = vsel %vm64, %v56, 0
    %v69 = vsel %vm64, %v57, 0
    %v72 = vsel %vm64, %v58, 0
    %v75 = vsel %vm64, %v59, 0
    %77 = vmatprep.subr.mxu0 %v41
    %78 = vmatpush1.msra.mxu0 %v40
    %79 = vmatprep.subr.mxu0 %v45
    %80 = vmatpush1.msra.mxu0 %v44
    %81 = vmatprep.subr.mxu0 %v49
    %82 = vmatpush1.msra.mxu0 %v48
    %83 = vmatprep.subr.mxu0 %v53
    %84 = vmatpush1.msra.mxu0 %v52
    %85 = vmatprep.subr.mxu0 %v69
    %86 = vmatpush1.msra.mxu0 %v66
    %87 = vmatprep.subr.mxu0 0.0
    %88 = vmatpush1.msra.mxu0 0.0
    %89 = vmatprep.subr.mxu0 0.0
    %90 = vmatpush1.msra.mxu0 0.0
    %91 = vmatprep.subr.mxu0 0.0
    %92 = vmatpush1.msra.mxu0 0.0
    %93 = vmatprep.subr.mxu0 0.0
    %94 = vmatpush1.msra.mxu0 0.0
    %95 = vmatprep.subr.mxu0 0.0
    %96 = vmatpush1.msra.mxu0 0.0
    %97 = vmatprep.subr.mxu0 0.0
    %98 = vmatpush1.msra.mxu0 0.0
    %99 = vmatprep.subr.mxu0 0.0
    %100 = vmatpush1.msra.mxu0 0.0
    %101 = vmatprep.subr.mxu0 0.0
    %102 = vmatpush1.msra.mxu0 0.0
    %103 = vmatprep.subr.mxu0 0.0
    %104 = vmatpush1.msra.mxu0 0.0
    %105 = vmatprep.subr.mxu0 0.0
    %106 = vmatpush1.msra.mxu0 0.0
    %107 = vmatprep.subr.mxu0 0.0
    %108 = vmatpush1.msra.mxu0 0.0
    %109 = vmatprep.subr.mxu0 0.0
    %110 = vmatpush1.msra.mxu0 0.0
    %111 = vmatprep.subr.mxu0 0.0
    %112 = vmatpush1.msra.mxu0 0.0
    %113 = vmatprep.subr.mxu0 0.0
    %114 = vmatpush1.msra.mxu0 0.0
    %115 = vmatprep.subr.mxu0 0.0
    %116 = vmatpush1.msra.mxu0 0.0
    %117 = vmatprep.subr.mxu0 0.0
    %118 = vmatpush1.msra.mxu0 0.0
    %119 = vmatprep.subr.mxu0 0.0
    %120 = vmatpush1.msra.mxu0 0.0
    %121 = vmatprep.subr.mxu0 0.0
    %122 = vmatpush1.msra.mxu0 0.0
    %123 = vmatprep.subr.mxu0 0.0
    %124 = vmatpush1.msra.mxu0 0.0
    %125 = vmatprep.subr.mxu0 0.0
    %126 = vmatpush1.msra.mxu0 0.0
    %127 = vmatprep.subr.mxu0 0.0
    %128 = vmatpush1.msra.mxu0 0.0
    %129 = vmatprep.subr.mxu0 0.0
    %130 = vmatpush1.msra.mxu0 0.0
    %131 = vmatprep.subr.mxu0 0.0
    %132 = vmatpush1.msra.mxu0 0.0
    %133 = vmatprep.subr.mxu0 0.0
    %134 = vmatpush1.msra.mxu0 0.0
    %135 = vmatprep.subr.mxu0 0.0
    %136 = vmatpush1.msra.mxu0 0.0
    %137 = vmatprep.subr.mxu0 0.0
    %138 = vmatpush1.msra.mxu0 0.0
    %139 = vmatprep.subr.mxu0 0.0
    %140 = vmatpush1.msra.mxu0 0.0
    %141 = vmatprep.mubr.f32.mxu0 0.0
    %142 = vmatmul.mubr.f32.gmra.mrb[0].mxu0 %v62
    %v143 = vpop.f32.mrb[0].mxu0
    %v144 = vadd.f32 0.0, %v143
    %v145 = vpop.f32.mrb[0].mxu0
    %v146 = vadd.f32 0.0, %v145
    %147 = vdwg.mxu0
    %148 = vmatprep.subr.mxu0 %v43
    %149 = vmatpush1.msra.mxu0 %v42
    %150 = vmatprep.subr.mxu0 %v47
    %151 = vmatpush1.msra.mxu0 %v46
    %152 = vmatprep.subr.mxu0 %v51
    %153 = vmatpush1.msra.mxu0 %v50
    %154 = vmatprep.subr.mxu0 %v55
    %155 = vmatpush1.msra.mxu0 %v54
    %156 = vmatprep.subr.mxu0 %v75
    %157 = vmatpush1.msra.mxu0 %v72
    %158 = vmatprep.subr.mxu0 0.0
    %159 = vmatpush1.msra.mxu0 0.0
    %160 = vmatprep.subr.mxu0 0.0
    %161 = vmatpush1.msra.mxu0 0.0
    %162 = vmatprep.subr.mxu0 0.0
    %163 = vmatpush1.msra.mxu0 0.0
    %164 = vmatprep.subr.mxu0 0.0
    %165 = vmatpush1.msra.mxu0 0.0
    %166 = vmatprep.subr.mxu0 0.0
    %167 = vmatpush1.msra.mxu0 0.0
    %168 = vmatprep.subr.mxu0 0.0
    %169 = vmatpush1.msra.mxu0 0.0
    %170 = vmatprep.subr.mxu0 0.0
    %171 = vmatpush1.msra.mxu0 0.0
    %172 = vmatprep.subr.mxu0 0.0
    %173 = vmatpush1.msra.mxu0 0.0
    %174 = vmatprep.subr.mxu0 0.0
    %175 = vmatpush1.msra.mxu0 0.0
    %176 = vmatprep.subr.mxu0 0.0
    %177 = vmatpush1.msra.mxu0 0.0
    %178 = vmatprep.subr.mxu0 0.0
    %179 = vmatpush1.msra.mxu0 0.0
    %180 = vmatprep.subr.mxu0 0.0
    %181 = vmatpush1.msra.mxu0 0.0
    %182 = vmatprep.subr.mxu0 0.0
    %183 = vmatpush1.msra.mxu0 0.0
    %184 = vmatprep.subr.mxu0 0.0
    %185 = vmatpush1.msra.mxu0 0.0
    %186 = vmatprep.subr.mxu0 0.0
    %187 = vmatpush1.msra.mxu0 0.0
    %188 = vmatprep.subr.mxu0 0.0
    %189 = vmatpush1.msra.mxu0 0.0
    %190 = vmatprep.subr.mxu0 0.0
    %191 = vmatpush1.msra.mxu0 0.0
    %192 = vmatprep.subr.mxu0 0.0
    %193 = vmatpush1.msra.mxu0 0.0
    %194 = vmatprep.subr.mxu0 0.0
    %195 = vmatpush1.msra.mxu0 0.0
    %196 = vmatprep.subr.mxu0 0.0
    %197 = vmatpush1.msra.mxu0 0.0
    %198 = vmatprep.subr.mxu0 0.0
    %199 = vmatpush1.msra.mxu0 0.0
    %200 = vmatprep.subr.mxu0 0.0
    %201 = vmatpush1.msra.mxu0 0.0
    %202 = vmatprep.subr.mxu0 0.0
    %203 = vmatpush1.msra.mxu0 0.0
    %204 = vmatprep.subr.mxu0 0.0
    %205 = vmatpush1.msra.mxu0 0.0
    %206 = vmatprep.subr.mxu0 0.0
    %207 = vmatpush1.msra.mxu0 0.0
    %208 = vmatprep.subr.mxu0 0.0
    %209 = vmatpush1.msra.mxu0 0.0
    %210 = vmatprep.subr.mxu0 0.0
    %211 = vmatpush1.msra.mxu0 0.0
    %212 = vmatprep.mubr.f32.mxu0 0.0
    %213 = vmatmul.mubr.f32.gmra.mrb[0].mxu0 %v62
    %v214 = vpop.f32.mrb[0].mxu0
    %v215 = vadd.f32 0.0, %v214
    %v216 = vpop.f32.mrb[0].mxu0
    %v217 = vadd.f32 0.0, %v216
    %218 = vdwg.mxu0
    %v219 = vadd.f32 %v144, %v146
    %v220 = vadd.f32 %v219, %v215
    %v221 = vadd.f32 %v220, %v217
    %222 = vadd.xlane.f32.xlu0 %v221
    %v223 = vpop.xlane.xlu0 %222
    %vm224 = vcmask 7168
    %225 = vst.msk [vmem:[%s2] sm:$0xff] %vm224, %v223
    %v226 = vmul.f32 %v144, %v144
    %v227 = vmul.f32 %v146, %v146
    %v228 = vmul.f32 %v215, %v215
    %v229 = vmul.f32 %v217, %v217
    %v230 = vadd.f32 %v226, %v227
    %v231 = vadd.f32 %v230, %v228
    %v232 = vadd.f32 %v231, %v229
    %233 = vadd.xlane.f32.xlu0 %v232
    %v234 = vpop.xlane.xlu0 %233
    %235 = vst.msk [vmem:[%s3] sm:$0xff] %vm224, %v234
    // Predicated region
    $region18: #{tpu_custom_call.1} parent=1 // pred_check
      _
    $region19: #{tpu_custom_call.1} parent=1 // pred_check_branch
      %237 = sbr.rel (0) target = $region21
    $region20: #{tpu_custom_call.1} parent=1 // pred_region
      _
    $region21: #{tpu_custom_call.1} parent=1 // pred_fallthru
      _
    // Predicated region
    $region22: #{tpu_custom_call.1} parent=1 // pred_check
      _
    $region23: #{tpu_custom_call.1} parent=1 // pred_check_branch
      %239 = sbr.rel (0) target = $region25
    $region24: #{tpu_custom_call.1} parent=1 // pred_region
      _
    $region25: #{tpu_custom_call.1} parent=1 // pred_fallthru
      _
    // Predicated region
    $region26: #{tpu_custom_call.1} parent=1 // pred_check
      _
    $region27: #{tpu_custom_call.1} parent=1 // pred_check_branch
      %241 = sbr.rel (0) target = $region29
    $region28: #{tpu_custom_call.1} parent=1 // pred_region
      _
    $region29: #{tpu_custom_call.1} parent=1 // pred_fallthru
      _
    // Predicated region
    $region30: #{tpu_custom_call.1} parent=1 // pred_check
      _
    $region31: #{tpu_custom_call.1} parent=1 // pred_check_branch
      %243 = sbr.rel (0) target = $region33
    $region32: #{tpu_custom_call.1} parent=1 // pred_region
      _
    $region33: #{tpu_custom_call.1} parent=1 // pred_fallthru
      _
    %244 = vsyncpa [#allocation3], 1
    %245 = vsyncpa [#allocation5], 1

</llo_original>
